<compile_context>
chip_gen: v5e
topology: v5e:2x2
jax: 0.10.0
libtpu: 0.0.40
codegen_flags: <defaults>
</compile_context>

<pallas_src>
import functools

import jax
import jax.numpy as jnp
import numpy as np
from jax import lax
from jax.experimental import pallas as pl
from jax.experimental.pallas import tpu as pltpu


def _drq_kernel(x_ref, cb_ref, c2_ref, scale_ref, codes_ref, part_ref, *, mm_dtype):
    """One batch-tile of the DRQ forward.

    x_ref     : (TN, D) f32   input rows for this tile
    cb_ref    : (K, D)        shared codebook (unscaled)
    c2_ref    : (1, K)  f32   per-codeword squared norms (precomputed in wrapper)
    scale_ref : (M,)    f32   per-stage scales, in SMEM
    codes_ref : (TN, M) i32   hard codes out
    part_ref  : (8,128) f32   per-tile loss partial sums (rows 0/1/2 used)
    """
    x = x_ref[...].astype(jnp.float32)            # (TN, D)
    cb_mm = cb_ref[...].astype(mm_dtype)          # (K, D) matmul operand
    c2_row = c2_ref[...].astype(jnp.float32)      # (1, K), broadcasts on the VPU
    TN, _D = x.shape
    K = cb_mm.shape[0]
    M = scale_ref.shape[0]

    iota_k = lax.broadcasted_iota(jnp.int32, (TN, K), 1)
    lane_m = lax.broadcasted_iota(jnp.int32, (TN, M), 1)

    # Collapsed running state:
    #   residual == x - sum_hard,  d_soft == x - sum_soft.
    residual = x
    d_soft = x
    sq_soft_acc = jnp.zeros_like(x)   # elementwise accumulation; reduced once at end
    sq_hard_acc = jnp.zeros_like(x)
    codes_acc = jnp.zeros((TN, M), jnp.int32)

    # M is small & static -> Python unroll.
    # TODO(synk): if M grows beyond ~8 stages, switch to
    # lax.fori_loop(..., unroll=True) with the state threaded as carries to
    # bound vreg live ranges.
    for i in range(M):
        s = scale_ref[i]                                             # scalar (SMEM)

        # distance up to a per-row constant (||r||^2 cancels in softmax/argmax):
        #   -||r - s*c||^2 == 2*s*(r.c) - s^2*||c||^2 (+ const per row)
        cross = lax.dot_general(residual.astype(mm_dtype), cb_mm,
                                (((1,), (1,)), ((), ())),
                                preferred_element_type=jnp.float32)  # (TN, K)
        distance = (2.0 * s) * cross - (s * s) * c2_row              # (TN, K)

        # soft assignment: softmax(distance) @ (s*cb)
        dmax = jnp.max(distance, axis=-1, keepdims=True)             # (TN, 1)
        e = jnp.exp(distance - dmax)
        denom = jnp.sum(e, axis=-1, keepdims=True)
        p = e * pl.reciprocal(denom, approx=True)                    # (TN, K)

        # hard assignment: first-max argmax (matches torch CPU tie-break)
        code = jnp.min(jnp.where(distance == dmax, iota_k, K),
                       axis=-1, keepdims=True)                       # (TN, 1) int32
        one_hot = (iota_k == code).astype(mm_dtype)                  # (TN, K)

        # two dots against the SAME codebook RHS (no (2TN,K) concat copy)
        soft = s * jnp.dot(p.astype(mm_dtype), cb_mm,
                           preferred_element_type=jnp.float32)       # (TN, D)
        hard = s * jnp.dot(one_hot, cb_mm,
                           preferred_element_type=jnp.float32)       # (TN, D)

        residual = residual - hard      # == x - sum_hard
        d_soft = d_soft - soft          # == x - sum_soft
        sq_soft_acc = sq_soft_acc + d_soft * d_soft
        sq_hard_acc = sq_hard_acc + residual * residual
        codes_acc = jnp.where(lane_m == i, code, codes_acc)

    # One cross-lane (XLU) reduction per loss term per tile.
    soft_sq = jnp.sum(sq_soft_acc)
    hard_sq = jnp.sum(sq_hard_acc)
    d_joint = residual - d_soft         # == -(sum_soft - sum_hard); squared below
    joint_sq = jnp.sum(d_joint * d_joint)

    # single lane-dense stores (no per-stage masked column writes)
    codes_ref[...] = codes_acc

    row = lax.broadcasted_iota(jnp.int32, (8, 128), 0)
    part_ref[...] = jnp.where(row == 0, soft_sq,
                    jnp.where(row == 1, hard_sq,
                    jnp.where(row == 2, joint_sq, 0.0)))


def _pick_tile_n(N, cap):
    """Largest divisor of N that is a multiple of 8, <= cap, preferring >=2 tiles."""
    assert N % 8 == 0, "N must be a multiple of 8"
    cands = [t for t in range(8, N + 1, 8) if N % t == 0]
    multi = [t for t in cands if t <= cap and N // t >= 2]   # >=2 tiles: v7x has 2 TCs
    if multi:
        return max(multi)
    fits = [t for t in cands if t <= cap]
    return max(fits) if fits else min(cands)


def drq_forward(x, codebook, scale, *, tile_n=None, use_bf16_matmul=None):
    """Pallas TPU implementation of DRQ.forward.

    Returns (hardCodes (N, M) int32, loss scalar float32)."""
    N, D = x.shape
    K, D2 = codebook.shape
    assert D == D2
    M = scale.shape[0]

    # bf16 MXU operands only at production shapes; f32 at toy shapes keeps the
    # argmax bit-exact against the f32 reference.
    if use_bf16_matmul is None:
        use_bf16_matmul = (K >= 128 and D >= 128)
    mm_dtype = jnp.bfloat16 if use_bf16_matmul else jnp.float32

    if tile_n is None:
        try:
            vmem_bytes = pltpu.get_tpu_info().vmem_capacity_bytes
        except Exception:  # interpret mode / unknown chip
            vmem_bytes = 128 << 20
        # Halve the tile cap on small-VMEM parts (v7x: 64 MiB).
        cap = 512 if vmem_bytes >= (96 << 20) else 256
        tile_n = _pick_tile_n(N, cap)
    assert N % tile_n == 0 and tile_n % 8 == 0, "tile_n must divide N and be a multiple of 8"
    num_tiles = N // tile_n

    # Rough per-call VMEM footprint: double-buffered pipelined operands + state
    # + per-stage (TN, K) intermediates. Only raise the scoped limit if needed.
    est_vmem = 4 * (2 * tile_n * D            # x (double-buffered)
                    + 2 * K * D + 2 * K       # codebook + ||c||^2 row
                    + 2 * tile_n * M          # codes out
                    + 2 * 8 * 128             # loss partials out
                    + 4 * tile_n * D          # residual / d_soft / sq accumulators
                    + 4 * tile_n * K)         # distance / e / p / one_hot
    compiler_kwargs = dict(dimension_semantics=("parallel",))
    if est_vmem > (32 << 20):
        compiler_kwargs["vmem_limit_bytes"] = min(int(est_vmem * 1.25), 96 << 20)

    cost = pl.CostEstimate(
        flops=6 * M * N * K * D,                  # cross + soft + hard matmuls
        transcendentals=M * N * (K + 1),          # exp + reciprocal
        bytes_accessed=4 * (N * D + K * D + K + N * M + num_tiles * 8 * 128),
    )

    # codeword squared norms precomputed once: (1, K)
    c2 = jnp.sum(codebook.astype(jnp.float32) ** 2, axis=-1)[None, :]

    codes, partials = pl.pallas_call(
        functools.partial(_drq_kernel, mm_dtype=mm_dtype),
        out_shape=(
            jax.ShapeDtypeStruct((N, M), jnp.int32),
            jax.ShapeDtypeStruct((num_tiles * 8, 128), jnp.float32),
        ),
        grid_spec=pltpu.PrefetchScalarGridSpec(
            num_scalar_prefetch=0,
            grid=(num_tiles,),
            in_specs=[
                pl.BlockSpec((tile_n, D), lambda i: (i, 0)),      # x tile
                pl.BlockSpec((K, D), lambda i: (0, 0)),           # full codebook
                pl.BlockSpec((1, K), lambda i: (0, 0)),           # ||c||^2 row
                pl.BlockSpec(memory_space=pltpu.SMEM),            # scale (M,) in SMEM
            ],
            out_specs=(
                pl.BlockSpec((tile_n, M), lambda i: (i, 0)),      # codes tile
                pl.BlockSpec((8, 128), lambda i: (i, 0)),         # per-tile loss partials
            ),
        ),
        compiler_params=pltpu.CompilerParams(**compiler_kwargs),
        cost_estimate=cost,
    )(x, codebook, c2, scale)

    part = partials.reshape(num_tiles, 8, 128)
    inv_nd = jnp.float32(1.0 / (N * D))
    soft_distortion = jnp.sum(part[:, 0, 0]) * inv_nd
    hard_distortion = jnp.sum(part[:, 1, 0]) * inv_nd
    joint_center = jnp.sum(part[:, 2, 0]) * inv_nd
    loss = 0.1 * soft_distortion + hard_distortion + 0.1 * joint_center
    return codes, loss


def _ref_drq(x, codebook, scale):
    """Pure-JAX reference mirroring the PyTorch forward."""
    M = scale.shape[0]
    K = codebook.shape[0]
    residual = x
    sum_soft = jnp.zeros_like(x)
    sum_hard = jnp.zeros_like(x)
    sd = jnp.float32(0.0)
    hd = jnp.float32(0.0)
    codes = []
    for i in range(M):
        cbi = codebook * scale[i]
        dist = -(jnp.sum(residual**2, -1, keepdims=True)
                 + jnp.sum(cbi**2, -1)[None, :]
                 - 2.0 * residual @ cbi.T)
        soft = jax.nn.softmax(dist, -1) @ cbi
        code = jnp.argmax(dist, axis=1)
        hard = jax.nn.one_hot(code, K, dtype=jnp.float32) @ cbi
        residual = residual - hard
        sum_soft = sum_soft + soft
        sum_hard = sum_hard + hard
        sd = sd + jnp.mean((x - sum_soft) ** 2)
        hd = hd + jnp.mean((x - sum_hard) ** 2)
        codes.append(code)
    jc = jnp.mean((sum_soft - sum_hard) ** 2)
    loss = 0.1 * sd + hd + 0.1 * jc
    return jnp.stack(codes, -1).astype(jnp.int32), loss


if __name__ == "__main__":
    # Small shapes consistent with the module: M stages, K codewords of dim D,
    # a batch of N feature vectors of dim D. N=16 -> auto tile_n=8 exercises the
    # 2-tile "parallel" grid and the per-tile partial-loss reduction.
    M, K, D, N = 4, 16, 32, 16

    key = jax.random.PRNGKey(0)
    kx, kc, ks = jax.random.split(key, 3)
    x = jax.random.normal(kx, (N, D), jnp.float32)
    codebook = jax.random.normal(kc, (K, D), jnp.float32)   # nn.Parameter(randn(K, D))
    scale = jax.random.normal(ks, (M,), jnp.float32)        # nn.Parameter(randn(M))

    codes, loss = drq_forward(x, codebook, scale)
    jax.block_until_ready((codes, loss))

    ref_codes, ref_loss = _ref_drq(x, codebook, scale)
    assert np.array_equal(np.asarray(codes), np.asarray(ref_codes)), "hardCodes mismatch"
    # approx reciprocal in the softmax denominator -> slightly looser loss tolerance
    assert np.allclose(float(loss), float(ref_loss), rtol=1e-3, atol=1e-3), "loss mismatch"

    print("KERNEL_OK")
</pallas_src>

<mosaic_0001>
module attributes {stable_mosaic.version = 11 : i64} {
  func.func @_drq_kernel(%arg0: i32, %arg1: memref<8x32xf32, #tpu.memory_space<vmem>>, %arg2: memref<16x32xf32, #tpu.memory_space<vmem>>, %arg3: memref<1x16xf32, #tpu.memory_space<vmem>>, %arg4: memref<4xf32, #tpu.memory_space<smem>>, %arg5: memref<8x4xi32, #tpu.memory_space<vmem>>, %arg6: memref<8x128xf32, #tpu.memory_space<vmem>>) attributes {dimension_semantics = [#tpu.dimension_semantics<parallel>], iteration_bounds = array<i64: 2>, scalar_prefetch = 0 : i64, scratch_operands = 0 : i64, tpu.core_type = #tpu.core_type<tc>, window_params = [{transform_indices = @transform_0, window_bounds = array<i64: 8, 32>}, {pipeline_mode = #tpu.pipeline_mode<synchronous>, transform_indices = @transform_1, window_bounds = array<i64: 16, 32>}, {pipeline_mode = #tpu.pipeline_mode<synchronous>, transform_indices = @transform_2, window_bounds = array<i64: 1, 16>}, {transform_indices = @transform_3, window_bounds = array<i64: 4>}, {transform_indices = @transform_4, window_bounds = array<i64: 8, 4>}, {transform_indices = @transform_5, window_bounds = array<i64: 8, 128>}]} {
    %c0 = arith.constant 0 : index
    %c0_0 = arith.constant 0 : index
    %0 = vector.load %arg1[%c0, %c0_0] : memref<8x32xf32, #tpu.memory_space<vmem>>, vector<8x32xf32>
    %c0_1 = arith.constant 0 : index
    %c0_2 = arith.constant 0 : index
    %1 = vector.load %arg2[%c0_1, %c0_2] : memref<16x32xf32, #tpu.memory_space<vmem>>, vector<16x32xf32>
    %c0_3 = arith.constant 0 : index
    %c0_4 = arith.constant 0 : index
    %2 = vector.load %arg3[%c0_3, %c0_4] : memref<1x16xf32, #tpu.memory_space<vmem>>, vector<1x16xf32>
    %3 = tpu.iota {dimensions = array<i32: 1>} : vector<8x16xi32>
    %4 = tpu.iota {dimensions = array<i32: 1>} : vector<8x4xi32>
    %cst = arith.constant 0.000000e+00 : f32
    %5 = vector.broadcast %cst : f32 to vector<8x32xf32>
    %cst_5 = arith.constant 0.000000e+00 : f32
    %6 = vector.broadcast %cst_5 : f32 to vector<8x32xf32>
    %c0_i32 = arith.constant 0 : i32
    %7 = vector.broadcast %c0_i32 : i32 to vector<8x4xi32>
    %c0_6 = arith.constant 0 : index
    %8 = memref.load %arg4[%c0_6] : memref<4xf32, #tpu.memory_space<smem>>
    %cst_7 = arith.constant dense<0.000000e+00> : vector<8x16xf32>
    %9 = tpu.matmul %0, %1, %cst_7 {dimension_numbers = #tpu.dot_dimension_numbers<[1], [1], [0], [0], [0, 0, 1, 0], [], []>} : vector<8x32xf32>, vector<16x32xf32>, vector<8x16xf32> -> vector<8x16xf32>
    %cst_8 = arith.constant 2.000000e+00 : f32
    %10 = arith.mulf %cst_8, %8 : f32
    %11 = vector.broadcast %10 : f32 to vector<8x16xf32>
    %12 = arith.mulf %11, %9 : vector<8x16xf32>
    %13 = arith.mulf %8, %8 : f32
    %14 = vector.broadcast %13 : f32 to vector<1x16xf32>
    %15 = arith.mulf %14, %2 : vector<1x16xf32>
    %16 = vector.broadcast %15 : vector<1x16xf32> to vector<8x16xf32>
    %17 = arith.subf %12, %16 : vector<8x16xf32>
    %cst_9 = arith.constant dense<0xFF800000> : vector<8xf32>
    %18 = vector.multi_reduction <maximumf>, %17, %cst_9 [1] : vector<8x16xf32> to vector<8xf32>
    %19 = vector.shape_cast %18 : vector<8xf32> to vector<8x1xf32>
    %20 = vector.broadcast %19 : vector<8x1xf32> to vector<8x16xf32>
    %21 = arith.subf %17, %20 : vector<8x16xf32>
    %22 = math.exp %21 : vector<8x16xf32>
    %cst_10 = arith.constant dense<0.000000e+00> : vector<8xf32>
    %23 = vector.multi_reduction <add>, %22, %cst_10 [1] : vector<8x16xf32> to vector<8xf32>
    %24 = vector.shape_cast %23 : vector<8xf32> to vector<8x1xf32>
    %25 = tpu.reciprocal %24 {approx = true} : vector<8x1xf32> -> vector<8x1xf32>
    %26 = vector.broadcast %25 : vector<8x1xf32> to vector<8x16xf32>
    %27 = arith.mulf %22, %26 : vector<8x16xf32>
    %28 = vector.broadcast %19 : vector<8x1xf32> to vector<8x16xf32>
    %29 = arith.cmpf oeq, %17, %28 : vector<8x16xf32>
    %c16_i32 = arith.constant 16 : i32
    %30 = vector.broadcast %c16_i32 : i32 to vector<8x16xi32>
    %31 = arith.select %29, %3, %30 : vector<8x16xi1>, vector<8x16xi32>
    %cst_11 = arith.constant dense<2147483647> : vector<8xi32>
    %32 = vector.multi_reduction <minsi>, %31, %cst_11 [1] : vector<8x16xi32> to vector<8xi32>
    %33 = vector.shape_cast %32 : vector<8xi32> to vector<8x1xi32>
    %34 = vector.broadcast %33 : vector<8x1xi32> to vector<8x16xi32>
    %35 = arith.cmpi eq, %3, %34 : vector<8x16xi32>
    %36 = arith.extui %35 : vector<8x16xi1> to vector<8x16xi32>
    %37 = arith.sitofp %36 : vector<8x16xi32> to vector<8x16xf32>
    %cst_12 = arith.constant dense<0.000000e+00> : vector<8x32xf32>
    %38 = tpu.matmul %27, %1, %cst_12 {dimension_numbers = #tpu.dot_dimension_numbers<[1], [0], [0], [1], [0, 0, 1, 1], [], []>} : vector<8x16xf32>, vector<16x32xf32>, vector<8x32xf32> -> vector<8x32xf32>
    %39 = vector.broadcast %8 : f32 to vector<8x32xf32>
    %40 = arith.mulf %39, %38 : vector<8x32xf32>
    %cst_13 = arith.constant dense<0.000000e+00> : vector<8x32xf32>
    %41 = tpu.matmul %37, %1, %cst_13 {dimension_numbers = #tpu.dot_dimension_numbers<[1], [0], [0], [1], [0, 0, 1, 1], [], []>} : vector<8x16xf32>, vector<16x32xf32>, vector<8x32xf32> -> vector<8x32xf32>
    %42 = vector.broadcast %8 : f32 to vector<8x32xf32>
    %43 = arith.mulf %42, %41 : vector<8x32xf32>
    %44 = arith.subf %0, %43 : vector<8x32xf32>
    %45 = arith.subf %0, %40 : vector<8x32xf32>
    %46 = arith.mulf %45, %45 : vector<8x32xf32>
    %47 = arith.addf %5, %46 : vector<8x32xf32>
    %48 = arith.mulf %44, %44 : vector<8x32xf32>
    %49 = arith.addf %6, %48 : vector<8x32xf32>
    %c0_i32_14 = arith.constant 0 : i32
    %50 = vector.broadcast %c0_i32_14 : i32 to vector<8x4xi32>
    %51 = arith.cmpi eq, %4, %50 : vector<8x4xi32>
    %52 = vector.shape_cast %33 : vector<8x1xi32> to vector<8x1xi32>
    %53 = vector.broadcast %52 : vector<8x1xi32> to vector<8x4xi32>
    %54 = arith.select %51, %53, %7 : vector<8x4xi1>, vector<8x4xi32>
    %c1 = arith.constant 1 : index
    %55 = memref.load %arg4[%c1] : memref<4xf32, #tpu.memory_space<smem>>
    %cst_15 = arith.constant dense<0.000000e+00> : vector<8x16xf32>
    %56 = tpu.matmul %44, %1, %cst_15 {dimension_numbers = #tpu.dot_dimension_numbers<[1], [1], [0], [0], [0, 0, 1, 0], [], []>} : vector<8x32xf32>, vector<16x32xf32>, vector<8x16xf32> -> vector<8x16xf32>
    %cst_16 = arith.constant 2.000000e+00 : f32
    %57 = arith.mulf %cst_16, %55 : f32
    %58 = vector.broadcast %57 : f32 to vector<8x16xf32>
    %59 = arith.mulf %58, %56 : vector<8x16xf32>
    %60 = arith.mulf %55, %55 : f32
    %61 = vector.broadcast %60 : f32 to vector<1x16xf32>
    %62 = arith.mulf %61, %2 : vector<1x16xf32>
    %63 = vector.broadcast %62 : vector<1x16xf32> to vector<8x16xf32>
    %64 = arith.subf %59, %63 : vector<8x16xf32>
    %cst_17 = arith.constant dense<0xFF800000> : vector<8xf32>
    %65 = vector.multi_reduction <maximumf>, %64, %cst_17 [1] : vector<8x16xf32> to vector<8xf32>
    %66 = vector.shape_cast %65 : vector<8xf32> to vector<8x1xf32>
    %67 = vector.broadcast %66 : vector<8x1xf32> to vector<8x16xf32>
    %68 = arith.subf %64, %67 : vector<8x16xf32>
    %69 = math.exp %68 : vector<8x16xf32>
    %cst_18 = arith.constant dense<0.000000e+00> : vector<8xf32>
    %70 = vector.multi_reduction <add>, %69, %cst_18 [1] : vector<8x16xf32> to vector<8xf32>
    %71 = vector.shape_cast %70 : vector<8xf32> to vector<8x1xf32>
    %72 = tpu.reciprocal %71 {approx = true} : vector<8x1xf32> -> vector<8x1xf32>
    %73 = vector.broadcast %72 : vector<8x1xf32> to vector<8x16xf32>
    %74 = arith.mulf %69, %73 : vector<8x16xf32>
    %75 = vector.broadcast %66 : vector<8x1xf32> to vector<8x16xf32>
    %76 = arith.cmpf oeq, %64, %75 : vector<8x16xf32>
    %c16_i32_19 = arith.constant 16 : i32
    %77 = vector.broadcast %c16_i32_19 : i32 to vector<8x16xi32>
    %78 = arith.select %76, %3, %77 : vector<8x16xi1>, vector<8x16xi32>
    %cst_20 = arith.constant dense<2147483647> : vector<8xi32>
    %79 = vector.multi_reduction <minsi>, %78, %cst_20 [1] : vector<8x16xi32> to vector<8xi32>
    %80 = vector.shape_cast %79 : vector<8xi32> to vector<8x1xi32>
    %81 = vector.broadcast %80 : vector<8x1xi32> to vector<8x16xi32>
    %82 = arith.cmpi eq, %3, %81 : vector<8x16xi32>
    %83 = arith.extui %82 : vector<8x16xi1> to vector<8x16xi32>
    %84 = arith.sitofp %83 : vector<8x16xi32> to vector<8x16xf32>
    %cst_21 = arith.constant dense<0.000000e+00> : vector<8x32xf32>
    %85 = tpu.matmul %74, %1, %cst_21 {dimension_numbers = #tpu.dot_dimension_numbers<[1], [0], [0], [1], [0, 0, 1, 1], [], []>} : vector<8x16xf32>, vector<16x32xf32>, vector<8x32xf32> -> vector<8x32xf32>
    %86 = vector.broadcast %55 : f32 to vector<8x32xf32>
    %87 = arith.mulf %86, %85 : vector<8x32xf32>
    %cst_22 = arith.constant dense<0.000000e+00> : vector<8x32xf32>
    %88 = tpu.matmul %84, %1, %cst_22 {dimension_numbers = #tpu.dot_dimension_numbers<[1], [0], [0], [1], [0, 0, 1, 1], [], []>} : vector<8x16xf32>, vector<16x32xf32>, vector<8x32xf32> -> vector<8x32xf32>
    %89 = vector.broadcast %55 : f32 to vector<8x32xf32>
    %90 = arith.mulf %89, %88 : vector<8x32xf32>
    %91 = arith.subf %44, %90 : vector<8x32xf32>
    %92 = arith.subf %45, %87 : vector<8x32xf32>
    %93 = arith.mulf %92, %92 : vector<8x32xf32>
    %94 = arith.addf %47, %93 : vector<8x32xf32>
    %95 = arith.mulf %91, %91 : vector<8x32xf32>
    %96 = arith.addf %49, %95 : vector<8x32xf32>
    %c1_i32 = arith.constant 1 : i32
    %97 = vector.broadcast %c1_i32 : i32 to vector<8x4xi32>
    %98 = arith.cmpi eq, %4, %97 : vector<8x4xi32>
    %99 = vector.shape_cast %80 : vector<8x1xi32> to vector<8x1xi32>
    %100 = vector.broadcast %99 : vector<8x1xi32> to vector<8x4xi32>
    %101 = arith.select %98, %100, %54 : vector<8x4xi1>, vector<8x4xi32>
    %c2 = arith.constant 2 : index
    %102 = memref.load %arg4[%c2] : memref<4xf32, #tpu.memory_space<smem>>
    %cst_23 = arith.constant dense<0.000000e+00> : vector<8x16xf32>
    %103 = tpu.matmul %91, %1, %cst_23 {dimension_numbers = #tpu.dot_dimension_numbers<[1], [1], [0], [0], [0, 0, 1, 0], [], []>} : vector<8x32xf32>, vector<16x32xf32>, vector<8x16xf32> -> vector<8x16xf32>
    %cst_24 = arith.constant 2.000000e+00 : f32
    %104 = arith.mulf %cst_24, %102 : f32
    %105 = vector.broadcast %104 : f32 to vector<8x16xf32>
    %106 = arith.mulf %105, %103 : vector<8x16xf32>
    %107 = arith.mulf %102, %102 : f32
    %108 = vector.broadcast %107 : f32 to vector<1x16xf32>
    %109 = arith.mulf %108, %2 : vector<1x16xf32>
    %110 = vector.broadcast %109 : vector<1x16xf32> to vector<8x16xf32>
    %111 = arith.subf %106, %110 : vector<8x16xf32>
    %cst_25 = arith.constant dense<0xFF800000> : vector<8xf32>
    %112 = vector.multi_reduction <maximumf>, %111, %cst_25 [1] : vector<8x16xf32> to vector<8xf32>
    %113 = vector.shape_cast %112 : vector<8xf32> to vector<8x1xf32>
    %114 = vector.broadcast %113 : vector<8x1xf32> to vector<8x16xf32>
    %115 = arith.subf %111, %114 : vector<8x16xf32>
    %116 = math.exp %115 : vector<8x16xf32>
    %cst_26 = arith.constant dense<0.000000e+00> : vector<8xf32>
    %117 = vector.multi_reduction <add>, %116, %cst_26 [1] : vector<8x16xf32> to vector<8xf32>
    %118 = vector.shape_cast %117 : vector<8xf32> to vector<8x1xf32>
    %119 = tpu.reciprocal %118 {approx = true} : vector<8x1xf32> -> vector<8x1xf32>
    %120 = vector.broadcast %119 : vector<8x1xf32> to vector<8x16xf32>
    %121 = arith.mulf %116, %120 : vector<8x16xf32>
    %122 = vector.broadcast %113 : vector<8x1xf32> to vector<8x16xf32>
    %123 = arith.cmpf oeq, %111, %122 : vector<8x16xf32>
    %c16_i32_27 = arith.constant 16 : i32
    %124 = vector.broadcast %c16_i32_27 : i32 to vector<8x16xi32>
    %125 = arith.select %123, %3, %124 : vector<8x16xi1>, vector<8x16xi32>
    %cst_28 = arith.constant dense<2147483647> : vector<8xi32>
    %126 = vector.multi_reduction <minsi>, %125, %cst_28 [1] : vector<8x16xi32> to vector<8xi32>
    %127 = vector.shape_cast %126 : vector<8xi32> to vector<8x1xi32>
    %128 = vector.broadcast %127 : vector<8x1xi32> to vector<8x16xi32>
    %129 = arith.cmpi eq, %3, %128 : vector<8x16xi32>
    %130 = arith.extui %129 : vector<8x16xi1> to vector<8x16xi32>
    %131 = arith.sitofp %130 : vector<8x16xi32> to vector<8x16xf32>
    %cst_29 = arith.constant dense<0.000000e+00> : vector<8x32xf32>
    %132 = tpu.matmul %121, %1, %cst_29 {dimension_numbers = #tpu.dot_dimension_numbers<[1], [0], [0], [1], [0, 0, 1, 1], [], []>} : vector<8x16xf32>, vector<16x32xf32>, vector<8x32xf32> -> vector<8x32xf32>
    %133 = vector.broadcast %102 : f32 to vector<8x32xf32>
    %134 = arith.mulf %133, %132 : vector<8x32xf32>
    %cst_30 = arith.constant dense<0.000000e+00> : vector<8x32xf32>
    %135 = tpu.matmul %131, %1, %cst_30 {dimension_numbers = #tpu.dot_dimension_numbers<[1], [0], [0], [1], [0, 0, 1, 1], [], []>} : vector<8x16xf32>, vector<16x32xf32>, vector<8x32xf32> -> vector<8x32xf32>
    %136 = vector.broadcast %102 : f32 to vector<8x32xf32>
    %137 = arith.mulf %136, %135 : vector<8x32xf32>
    %138 = arith.subf %91, %137 : vector<8x32xf32>
    %139 = arith.subf %92, %134 : vector<8x32xf32>
    %140 = arith.mulf %139, %139 : vector<8x32xf32>
    %141 = arith.addf %94, %140 : vector<8x32xf32>
    %142 = arith.mulf %138, %138 : vector<8x32xf32>
    %143 = arith.addf %96, %142 : vector<8x32xf32>
    %c2_i32 = arith.constant 2 : i32
    %144 = vector.broadcast %c2_i32 : i32 to vector<8x4xi32>
    %145 = arith.cmpi eq, %4, %144 : vector<8x4xi32>
    %146 = vector.shape_cast %127 : vector<8x1xi32> to vector<8x1xi32>
    %147 = vector.broadcast %146 : vector<8x1xi32> to vector<8x4xi32>
    %148 = arith.select %145, %147, %101 : vector<8x4xi1>, vector<8x4xi32>
    %c3 = arith.constant 3 : index
    %149 = memref.load %arg4[%c3] : memref<4xf32, #tpu.memory_space<smem>>
    %cst_31 = arith.constant dense<0.000000e+00> : vector<8x16xf32>
    %150 = tpu.matmul %138, %1, %cst_31 {dimension_numbers = #tpu.dot_dimension_numbers<[1], [1], [0], [0], [0, 0, 1, 0], [], []>} : vector<8x32xf32>, vector<16x32xf32>, vector<8x16xf32> -> vector<8x16xf32>
    %cst_32 = arith.constant 2.000000e+00 : f32
    %151 = arith.mulf %cst_32, %149 : f32
    %152 = vector.broadcast %151 : f32 to vector<8x16xf32>
    %153 = arith.mulf %152, %150 : vector<8x16xf32>
    %154 = arith.mulf %149, %149 : f32
    %155 = vector.broadcast %154 : f32 to vector<1x16xf32>
    %156 = arith.mulf %155, %2 : vector<1x16xf32>
    %157 = vector.broadcast %156 : vector<1x16xf32> to vector<8x16xf32>
    %158 = arith.subf %153, %157 : vector<8x16xf32>
    %cst_33 = arith.constant dense<0xFF800000> : vector<8xf32>
    %159 = vector.multi_reduction <maximumf>, %158, %cst_33 [1] : vector<8x16xf32> to vector<8xf32>
    %160 = vector.shape_cast %159 : vector<8xf32> to vector<8x1xf32>
    %161 = vector.broadcast %160 : vector<8x1xf32> to vector<8x16xf32>
    %162 = arith.subf %158, %161 : vector<8x16xf32>
    %163 = math.exp %162 : vector<8x16xf32>
    %cst_34 = arith.constant dense<0.000000e+00> : vector<8xf32>
    %164 = vector.multi_reduction <add>, %163, %cst_34 [1] : vector<8x16xf32> to vector<8xf32>
    %165 = vector.shape_cast %164 : vector<8xf32> to vector<8x1xf32>
    %166 = tpu.reciprocal %165 {approx = true} : vector<8x1xf32> -> vector<8x1xf32>
    %167 = vector.broadcast %166 : vector<8x1xf32> to vector<8x16xf32>
    %168 = arith.mulf %163, %167 : vector<8x16xf32>
    %169 = vector.broadcast %160 : vector<8x1xf32> to vector<8x16xf32>
    %170 = arith.cmpf oeq, %158, %169 : vector<8x16xf32>
    %c16_i32_35 = arith.constant 16 : i32
    %171 = vector.broadcast %c16_i32_35 : i32 to vector<8x16xi32>
    %172 = arith.select %170, %3, %171 : vector<8x16xi1>, vector<8x16xi32>
    %cst_36 = arith.constant dense<2147483647> : vector<8xi32>
    %173 = vector.multi_reduction <minsi>, %172, %cst_36 [1] : vector<8x16xi32> to vector<8xi32>
    %174 = vector.shape_cast %173 : vector<8xi32> to vector<8x1xi32>
    %175 = vector.broadcast %174 : vector<8x1xi32> to vector<8x16xi32>
    %176 = arith.cmpi eq, %3, %175 : vector<8x16xi32>
    %177 = arith.extui %176 : vector<8x16xi1> to vector<8x16xi32>
    %178 = arith.sitofp %177 : vector<8x16xi32> to vector<8x16xf32>
    %cst_37 = arith.constant dense<0.000000e+00> : vector<8x32xf32>
    %179 = tpu.matmul %168, %1, %cst_37 {dimension_numbers = #tpu.dot_dimension_numbers<[1], [0], [0], [1], [0, 0, 1, 1], [], []>} : vector<8x16xf32>, vector<16x32xf32>, vector<8x32xf32> -> vector<8x32xf32>
    %180 = vector.broadcast %149 : f32 to vector<8x32xf32>
    %181 = arith.mulf %180, %179 : vector<8x32xf32>
    %cst_38 = arith.constant dense<0.000000e+00> : vector<8x32xf32>
    %182 = tpu.matmul %178, %1, %cst_38 {dimension_numbers = #tpu.dot_dimension_numbers<[1], [0], [0], [1], [0, 0, 1, 1], [], []>} : vector<8x16xf32>, vector<16x32xf32>, vector<8x32xf32> -> vector<8x32xf32>
    %183 = vector.broadcast %149 : f32 to vector<8x32xf32>
    %184 = arith.mulf %183, %182 : vector<8x32xf32>
    %185 = arith.subf %138, %184 : vector<8x32xf32>
    %186 = arith.subf %139, %181 : vector<8x32xf32>
    %187 = arith.mulf %186, %186 : vector<8x32xf32>
    %188 = arith.addf %141, %187 : vector<8x32xf32>
    %189 = arith.mulf %185, %185 : vector<8x32xf32>
    %190 = arith.addf %143, %189 : vector<8x32xf32>
    %c3_i32 = arith.constant 3 : i32
    %191 = vector.broadcast %c3_i32 : i32 to vector<8x4xi32>
    %192 = arith.cmpi eq, %4, %191 : vector<8x4xi32>
    %193 = vector.shape_cast %174 : vector<8x1xi32> to vector<8x1xi32>
    %194 = vector.broadcast %193 : vector<8x1xi32> to vector<8x4xi32>
    %195 = arith.select %192, %194, %148 : vector<8x4xi1>, vector<8x4xi32>
    %196 = vector.shape_cast %188 : vector<8x32xf32> to vector<1x8x32xf32>
    %cst_39 = arith.constant dense<0.000000e+00> : vector<1xf32>
    %197 = vector.multi_reduction <add>, %196, %cst_39 [1, 2] : vector<1x8x32xf32> to vector<1xf32>
    %198 = vector.shape_cast %197 : vector<1xf32> to vector<1x1x1xf32>
    %199 = vector.extract %198[0, 0, 0] : f32 from vector<1x1x1xf32>
    %200 = vector.shape_cast %190 : vector<8x32xf32> to vector<1x8x32xf32>
    %cst_40 = arith.constant dense<0.000000e+00> : vector<1xf32>
    %201 = vector.multi_reduction <add>, %200, %cst_40 [1, 2] : vector<1x8x32xf32> to vector<1xf32>
    %202 = vector.shape_cast %201 : vector<1xf32> to vector<1x1x1xf32>
    %203 = vector.extract %202[0, 0, 0] : f32 from vector<1x1x1xf32>
    %204 = arith.subf %185, %186 : vector<8x32xf32>
    %205 = arith.mulf %204, %204 : vector<8x32xf32>
    %206 = vector.shape_cast %205 : vector<8x32xf32> to vector<1x8x32xf32>
    %cst_41 = arith.constant dense<0.000000e+00> : vector<1xf32>
    %207 = vector.multi_reduction <add>, %206, %cst_41 [1, 2] : vector<1x8x32xf32> to vector<1xf32>
    %208 = vector.shape_cast %207 : vector<1xf32> to vector<1x1x1xf32>
    %209 = vector.extract %208[0, 0, 0] : f32 from vector<1x1x1xf32>
    %c0_42 = arith.constant 0 : index
    %c0_43 = arith.constant 0 : index
    %210 = vector.load %arg5[%c0_42, %c0_43] : memref<8x4xi32, #tpu.memory_space<vmem>>, vector<8x4xi32>
    tpu.vector_store %arg5[%c0_42, %c0_43], %195 {strides = array<i32>} : memref<8x4xi32, #tpu.memory_space<vmem>>, vector<8x4xi32>,
    %211 = tpu.iota {dimensions = array<i32: 0>} : vector<8x128xi32>
    %c0_i32_44 = arith.constant 0 : i32
    %212 = vector.broadcast %c0_i32_44 : i32 to vector<8x128xi32>
    %213 = arith.cmpi eq, %211, %212 : vector<8x128xi32>
    %c1_i32_45 = arith.constant 1 : i32
    %214 = vector.broadcast %c1_i32_45 : i32 to vector<8x128xi32>
    %215 = arith.cmpi eq, %211, %214 : vector<8x128xi32>
    %c2_i32_46 = arith.constant 2 : i32
    %216 = vector.broadcast %c2_i32_46 : i32 to vector<8x128xi32>
    %217 = arith.cmpi eq, %211, %216 : vector<8x128xi32>
    %cst_47 = arith.constant 0.000000e+00 : f32
    %218 = vector.broadcast %209 : f32 to vector<8x128xf32>
    %219 = vector.broadcast %cst_47 : f32 to vector<8x128xf32>
    %220 = arith.select %217, %218, %219 : vector<8x128xi1>, vector<8x128xf32>
    %221 = vector.broadcast %203 : f32 to vector<8x128xf32>
    %222 = arith.select %215, %221, %220 : vector<8x128xi1>, vector<8x128xf32>
    %223 = vector.broadcast %199 : f32 to vector<8x128xf32>
    %224 = arith.select %213, %223, %222 : vector<8x128xi1>, vector<8x128xf32>
    %c0_48 = arith.constant 0 : index
    %c0_49 = arith.constant 0 : index
    %225 = vector.load %arg6[%c0_48, %c0_49] : memref<8x128xf32, #tpu.memory_space<vmem>>, vector<8x128xf32>
    tpu.vector_store %arg6[%c0_48, %c0_49], %224 {strides = array<i32>} : memref<8x128xf32, #tpu.memory_space<vmem>>, vector<8x128xf32>,
    return
  }
  func.func @transform_0(%arg0: i32) -> (i32, i32) {
    %c0_i32 = arith.constant 0 : i32
    %c0_i32_0 = arith.constant 0 : i32
    return %arg0, %c0_i32 : i32, i32
  }
  func.func @transform_1(%arg0: i32) -> (i32, i32) {
    %c0_i32 = arith.constant 0 : i32
    %c0_i32_0 = arith.constant 0 : i32
    %c0_i32_1 = arith.constant 0 : i32
    return %c0_i32, %c0_i32_0 : i32, i32
  }
  func.func @transform_2(%arg0: i32) -> (i32, i32) {
    %c0_i32 = arith.constant 0 : i32
    %c0_i32_0 = arith.constant 0 : i32
    %c0_i32_1 = arith.constant 0 : i32
    return %c0_i32, %c0_i32_0 : i32, i32
  }
  func.func @transform_3(%arg0: i32) -> i32 {
    %c0_i32 = arith.constant 0 : i32
    %c0_i32_0 = arith.constant 0 : i32
    return %c0_i32 : i32
  }
  func.func @transform_4(%arg0: i32) -> (i32, i32) {
    %c0_i32 = arith.constant 0 : i32
    %c0_i32_0 = arith.constant 0 : i32
    return %arg0, %c0_i32 : i32, i32
  }
  func.func @transform_5(%arg0: i32) -> (i32, i32) {
    %c0_i32 = arith.constant 0 : i32
    %c0_i32_0 = arith.constant 0 : i32
    return %arg0, %c0_i32 : i32, i32
  }
}

</mosaic_0001>

<llo_original>
// kernel: tpu_custom_call.1
$region0: #{tpu_custom_call.1}
  #allocation0 [shape = 'u32[]', space=smem, size = 0x4, offset = 0x4, fixed_abs, tag = 'smem constant byte address 0x4 - core index']
  #allocation1 [shape = 'u32[72,128]{1,0:T(1,128)}', space=vmem, size = 0x9000, scoped, tag = 'internal scratch']
  %s0 = inlined_call_operand.hbm [shape: f32[16,32], index: 0, kind: input, shape index: {}]
  %s1 = inlined_call_operand.hbm [shape: f32[16,32], index: 1, kind: input, shape index: {}]
  %s2 = inlined_call_operand.vmem [shape: f32[1,16], index: 2, kind: input, shape index: {}]
  %s3 = inlined_call_operand.vmem [shape: f32[4], index: 3, kind: input, shape index: {}]
  %s4 = inlined_call_operand.vmem [shape: s32[16,4], index: 4, kind: output, shape index: {0}]
  %s5 = inlined_call_operand.hbm [shape: f32[16,128], index: 5, kind: output, shape index: {1}]
  %6 = xla_tuple %s4, %s5
  %s7 = sld [smem:[#allocation0]]
  $region69: #{tpu_custom_call.1} parent=0
    _
  %s9 = ssub.s32 1, %s7
  %s10 = scalar_select 0, %s9, %s7
  $region1: #{tpu_custom_call.1} parent=0
    #allocation2 [shape = 'u8[8192]{0}', space=vmem, size = 0x2000, scoped, tag = 'input window, operand 0']
    #allocation3 [shape = 's32[2]{0}', space=sflag, size = 0x8, scoped, tag = 'scoped memory for tpu_custom_call.1']
    #allocation4 [shape = 's32[2]{0}', space=sflag, size = 0x8, scoped, tag = 'scoped memory for tpu_custom_call.1']
    #allocation5 [shape = 's32[2]{0}', space=sflag, size = 0x8, scoped, tag = 'scoped memory for tpu_custom_call.1']
    #allocation6 [shape = 'u8[8192]{0}', space=vmem, size = 0x2000, scoped, tag = 'input window, operand 1, single buffered']
    #allocation7 [shape = 's32[1]{0}', space=sflag, size = 0x4, scoped, tag = 'scoped memory for tpu_custom_call.1']
    #allocation8 [shape = 'u8[512]{0}', space=smem, size = 0x200, scoped, tag = 'input window, operand 3, single buffered']
    #allocation9 [shape = 'u8[8192]{0}', space=vmem, size = 0x2000, scoped, tag = 'output window, operand 1']
    %11 = vsyncpa [#allocation3], 0
    %s12 = scalar_lea.sflag [#allocation3], 1
    %13 = vsyncpa %s12, 0
    %14 = vsyncpa [#allocation7], 0
    %15 = vsyncpa [#allocation5], 0
    %16 = vsyncpa [#allocation4], 0
    %s17 = scalar_lea.sflag [#allocation4], 1
    %18 = vsyncpa %s17, 0
    loop: start=0, step=1, limit=4
    $region2: #{tpu_custom_call.1} parent=1 // loop_pre_header
      _
    $region3: #{tpu_custom_call.1} parent=1 // loop_header
      %s20 = sphi 0, %s24
      %p21 = scmp.ge.s32.totalorder %s20, 4
      %s30 = sphi 0, %s32
      %s33 = sphi 0, %s30
      %s34 = sphi 0, %s33
      %s50 = sphi 0, %s34
      %s54 = sphi 0, %s54
      %s56 = sphi 0, %s54
      %s57 = sphi 0, %s56
      %s71 = sphi 0, %s57
      %s75 = sphi 0, %s75
      %s77 = sphi 0, %s75
      %s78 = sphi 0, %s77
      %s92 = sphi 0, %s78
      %s96 = sphi 0, %s96
      %s98 = sphi 0, %s96
      %s99 = sphi 0, %s98
      %s113 = sphi 0, %s99
      %s119 = sphi 0, %s121
      %s122 = sphi 0, %s119
      %s123 = sphi 0, %s122
      %s139 = sphi 0, %s123
      %s145 = sphi 0, %s147
      %s148 = sphi 0, %s145
      %s149 = sphi 0, %s148
      %s165 = sphi 0, %s149
    $region4: #{tpu_custom_call.1} parent=1 // loop_header_branch
      %23 = sbr.rel (%p21) target = $region8
    $region5: #{tpu_custom_call.1} parent=1 // loop_body
      %s25 = ssub.s32 %s20, 1
      %s26 = ssub.s32 %s20, 2
      %s27 = sadd.s32 %s20, 1
      %s28 = ssub.s32 %s20, %s27
      %p29 = scmp.eq.s32.totalorder %s28, 0
      %s31 = sadd.s32 %s30, 1
      %s32 = scalar_select %p29, %s30, %s31
      %p35 = pneg %p29
      %p36 = scmp.eq.s32.totalorder %s20, 1
      %p37 = por %p35, %p36
      %p38 = scmp.ne.s32.totalorder %s30, %s33
      %p39 = scmp.eq.s32.totalorder %s20, 0
      %p40 = por %p38, %p39
      %p41 = scmp.ne.s32.totalorder %s30, %s33
      %p42 = scmp.eq.s32.totalorder %s25, 1
      %p43 = por %p41, %p42
      %p44 = scmp.ne.s32.totalorder %s33, %s34
      %p45 = scmp.eq.s32.totalorder %s25, 0
      %p46 = por %p44, %p45
      %p47 = scmp.ne.s32.totalorder %s33, %s34
      %p48 = scmp.eq.s32.totalorder %s26, 1
      %p49 = por %p47, %p48
      %p51 = scmp.ne.s32.totalorder %s34, %s50
      %p52 = scmp.eq.s32.totalorder %s26, 0
      %p53 = por %p51, %p52
      %s55 = sadd.s32 %s54, 1
      %p58 = scmp.eq.s32.totalorder %s20, 1
      %p59 = scmp.ne.s32.totalorder %s54, %s56
      %p60 = scmp.eq.s32.totalorder %s20, 0
      %p61 = por %p59, %p60
      %p62 = scmp.ne.s32.totalorder %s54, %s56
      %p63 = scmp.eq.s32.totalorder %s25, 1
      %p64 = por %p62, %p63
      %p65 = scmp.ne.s32.totalorder %s56, %s57
      %p66 = scmp.eq.s32.totalorder %s25, 0
      %p67 = por %p65, %p66
      %p68 = scmp.ne.s32.totalorder %s56, %s57
      %p69 = scmp.eq.s32.totalorder %s26, 1
      %p70 = por %p68, %p69
      %p72 = scmp.ne.s32.totalorder %s57, %s71
      %p73 = scmp.eq.s32.totalorder %s26, 0
      %p74 = por %p72, %p73
      %s76 = sadd.s32 %s75, 1
      %p79 = scmp.eq.s32.totalorder %s20, 1
      %p80 = scmp.ne.s32.totalorder %s75, %s77
      %p81 = scmp.eq.s32.totalorder %s20, 0
      %p82 = por %p80, %p81
      %p83 = scmp.ne.s32.totalorder %s75, %s77
      %p84 = scmp.eq.s32.totalorder %s25, 1
      %p85 = por %p83, %p84
      %p86 = scmp.ne.s32.totalorder %s77, %s78
      %p87 = scmp.eq.s32.totalorder %s25, 0
      %p88 = por %p86, %p87
      %p89 = scmp.ne.s32.totalorder %s77, %s78
      %p90 = scmp.eq.s32.totalorder %s26, 1
      %p91 = por %p89, %p90
      %p93 = scmp.ne.s32.totalorder %s78, %s92
      %p94 = scmp.eq.s32.totalorder %s26, 0
      %p95 = por %p93, %p94
      %s97 = sadd.s32 %s96, 1
      %p100 = scmp.eq.s32.totalorder %s20, 1
      %p101 = scmp.ne.s32.totalorder %s96, %s98
      %p102 = scmp.eq.s32.totalorder %s20, 0
      %p103 = por %p101, %p102
      %p104 = scmp.ne.s32.totalorder %s96, %s98
      %p105 = scmp.eq.s32.totalorder %s25, 1
      %p106 = por %p104, %p105
      %p107 = scmp.ne.s32.totalorder %s98, %s99
      %p108 = scmp.eq.s32.totalorder %s25, 0
      %p109 = por %p107, %p108
      %p110 = scmp.ne.s32.totalorder %s98, %s99
      %p111 = scmp.eq.s32.totalorder %s26, 1
      %p112 = por %p110, %p111
      %p114 = scmp.ne.s32.totalorder %s99, %s113
      %p115 = scmp.eq.s32.totalorder %s26, 0
      %p116 = por %p114, %p115
      %s117 = ssub.s32 %s20, %s27
      %p118 = scmp.eq.s32.totalorder %s117, 0
      %s120 = sadd.s32 %s119, 1
      %s121 = scalar_select %p118, %s119, %s120
      %p124 = pneg %p118
      %p125 = scmp.eq.s32.totalorder %s20, 1
      %p126 = por %p124, %p125
      %p127 = scmp.ne.s32.totalorder %s119, %s122
      %p128 = scmp.eq.s32.totalorder %s20, 0
      %p129 = por %p127, %p128
      %p130 = scmp.ne.s32.totalorder %s119, %s122
      %p131 = scmp.eq.s32.totalorder %s25, 1
      %p132 = por %p130, %p131
      %p133 = scmp.ne.s32.totalorder %s122, %s123
      %p134 = scmp.eq.s32.totalorder %s25, 0
      %p135 = por %p133, %p134
      %p136 = scmp.ne.s32.totalorder %s122, %s123
      %p137 = scmp.eq.s32.totalorder %s26, 1
      %p138 = por %p136, %p137
      %p140 = scmp.ne.s32.totalorder %s123, %s139
      %p141 = scmp.eq.s32.totalorder %s26, 0
      %p142 = por %p140, %p141
      %s143 = ssub.s32 %s20, %s27
      %p144 = scmp.eq.s32.totalorder %s143, 0
      %s146 = sadd.s32 %s145, 1
      %s147 = scalar_select %p144, %s145, %s146
      %p150 = pneg %p144
      %p151 = scmp.eq.s32.totalorder %s20, 1
      %p152 = por %p150, %p151
      %p153 = scmp.ne.s32.totalorder %s145, %s148
      %p154 = scmp.eq.s32.totalorder %s20, 0
      %p155 = por %p153, %p154
      %p156 = scmp.ne.s32.totalorder %s145, %s148
      %p157 = scmp.eq.s32.totalorder %s25, 1
      %p158 = por %p156, %p157
      %p159 = scmp.ne.s32.totalorder %s148, %s149
      %p160 = scmp.eq.s32.totalorder %s25, 0
      %p161 = por %p159, %p160
      %p162 = scmp.ne.s32.totalorder %s148, %s149
      %p163 = scmp.eq.s32.totalorder %s26, 1
      %p164 = por %p162, %p163
      %p166 = scmp.ne.s32.totalorder %s149, %s165
      %p167 = scmp.eq.s32.totalorder %s26, 0
      %p168 = por %p166, %p167
      %p169 = scmp.le.s32.totalorder 1, %s20
      %p170 = scmp.lt.s32.totalorder %s20, 3
      %p171 = pnand %p169, %p170
      %p172 = pneg %p171
      // Predicated region
      $region9: #{tpu_custom_call.1} parent=5 // pred_check
        _
      $region10: #{tpu_custom_call.1} parent=5 // pred_check_branch
        %174 = sbr.rel (%p171) target = $region12
      $region11: #{tpu_custom_call.1} parent=5 // pred_region
        %s175 = ssub.s32 %s20, 1
        // Predicated region
        $region13: #{tpu_custom_call.1} parent=11 // pred_check
          %p176 = pneg %p67
        $region14: #{tpu_custom_call.1} parent=11 // pred_check_branch
          %178 = sbr.rel (%p176) target = $region16
        $region15: #{tpu_custom_call.1} parent=11 // pred_region
          %180 = vsyncadd [#allocation7], 0
          %s181 = sshll.u32 %s1, 4
          %s182 = int_to_ptr.hbm [resolvable:$true] %s181
          %s183 = sshll.u32 [#allocation6], 4
          %s184 = int_to_ptr.vmem [resolvable:$true] %s183
          %189 = dma.hbm_to_vmem [thread:$0]  %s182, 256, %s184, [#allocation7], 128, 128, 8
        $region16: #{tpu_custom_call.1} parent=11 // pred_fallthru
          _
        // Predicated region
        $region17: #{tpu_custom_call.1} parent=11 // pred_check
          %p190 = pneg %p88
        $region18: #{tpu_custom_call.1} parent=11 // pred_check_branch
          %192 = sbr.rel (%p190) target = $region20
        $region19: #{tpu_custom_call.1} parent=11 // pred_region
          _
        $region20: #{tpu_custom_call.1} parent=11 // pred_fallthru
          _
        // Predicated region
        $region21: #{tpu_custom_call.1} parent=11 // pred_check
          %p193 = pneg %p109
        $region22: #{tpu_custom_call.1} parent=11 // pred_check_branch
          %195 = sbr.rel (%p193) target = $region24
        $region23: #{tpu_custom_call.1} parent=11 // pred_region
          %197 = vsyncadd [#allocation5], 0
          %s199 = sshll.u32 %s3, 4
          %s200 = int_to_ptr.vmem [resolvable:$true] %s199
          %202 = dma.vmem_to_smem %s200, 16, [#allocation8], [#allocation5]
        $region24: #{tpu_custom_call.1} parent=11 // pred_fallthru
          _
      $region12: #{tpu_custom_call.1} parent=5 // pred_fallthru
        _
      %p203 = scmp.lt.s32.totalorder %s20, 2
      // Predicated region
      $region25: #{tpu_custom_call.1} parent=5 // pred_check
        %p204 = pneg %p203
      $region26: #{tpu_custom_call.1} parent=5 // pred_check_branch
        %206 = sbr.rel (%p204) target = $region28
      $region27: #{tpu_custom_call.1} parent=5 // pred_region
        // Predicated region
        $region29: #{tpu_custom_call.1} parent=27 // pred_check
          %p207 = pneg %p40
        $region30: #{tpu_custom_call.1} parent=27 // pred_check_branch
          %209 = sbr.rel (%p207) target = $region32
        $region31: #{tpu_custom_call.1} parent=27 // pred_region
          %s210 = sand.u32 %s30, 1
          %s211 = scalar_lea.sflag [#allocation3], %s210
          %s212 = sand.u32 %s30, 1
          %s213 = smul.addr %s212, 8
          %s214 = scalar_lea.vmem [#allocation2], %s213
          %216 = vsyncadd %s211, 0
          %s217 = smul.addr %s20, 8
          %s218 = scalar_lea.hbm %s0, %s217
          %s220 = sshll.u32 %s218, 4
          %s221 = int_to_ptr.hbm [resolvable:$true] %s220
          %s222 = sshll.u32 %s214, 4
          %s223 = int_to_ptr.vmem [resolvable:$true] %s222
          %225 = dma.hbm_to_vmem [thread:$0]  %s221, 128, %s223, %s211
        $region32: #{tpu_custom_call.1} parent=27 // pred_fallthru
          _
      $region28: #{tpu_custom_call.1} parent=5 // pred_fallthru
        _
      %p226 = scmp.le.s32.totalorder 1, %s20
      %p227 = scmp.lt.s32.totalorder %s20, 3
      %p228 = pnand %p226, %p227
      %p229 = pneg %p228
      // Predicated region
      $region33: #{tpu_custom_call.1} parent=5 // pred_check
        _
      $region34: #{tpu_custom_call.1} parent=5 // pred_check_branch
        %231 = sbr.rel (%p228) target = $region36
      $region35: #{tpu_custom_call.1} parent=5 // pred_region
        %s232 = ssub.s32 %s20, 1
        %s233 = sand.u32 %s33, 1
        %s234 = scalar_lea.sflag [#allocation3], %s233
        %s235 = sand.u32 %s33, 1
        %s236 = smul.addr %s235, 8
        %s237 = scalar_lea.vmem [#allocation2], %s236
        // Predicated region
        $region37: #{tpu_custom_call.1} parent=35 // pred_check
          %p238 = pneg %p46
        $region38: #{tpu_custom_call.1} parent=35 // pred_check_branch
          %240 = sbr.rel (%p238) target = $region40
        $region39: #{tpu_custom_call.1} parent=35 // pred_region
          %242 = dma.done %s234, 128
        $region40: #{tpu_custom_call.1} parent=35 // pred_fallthru
          _
        // Predicated region
        $region41: #{tpu_custom_call.1} parent=35 // pred_check
          %p243 = pneg %p67
        $region42: #{tpu_custom_call.1} parent=35 // pred_check_branch
          %245 = sbr.rel (%p243) target = $region44
        $region43: #{tpu_custom_call.1} parent=35 // pred_region
          %247 = dma.done [#allocation7], 256
        $region44: #{tpu_custom_call.1} parent=35 // pred_fallthru
          _
        // Predicated region
        $region45: #{tpu_custom_call.1} parent=35 // pred_check
          %p248 = pneg %p109
        $region46: #{tpu_custom_call.1} parent=35 // pred_check_branch
          %250 = sbr.rel (%p248) target = $region48
        $region47: #{tpu_custom_call.1} parent=35 // pred_region
          %252 = dma.done [#allocation5], 16
        $region48: #{tpu_custom_call.1} parent=35 // pred_fallthru
          _
        %253 = sfence
        %s254 = sand.u32 %s33, 1
        %s255 = scalar_lea.sflag [#allocation3], %s254
        %s256 = sand.u32 %s33, 1
        %s257 = smul.addr %s256, 8
        %s258 = scalar_lea.vmem [#allocation2], %s257
        %p259 = pneg %p46
        %p260 = pneg %p43
        %p261 = pneg %p67
        %p262 = pneg %p64
        %p263 = pneg %p88
        %p264 = pneg %p85
        %p265 = pneg %p109
        %p266 = pneg %p106
        %p267 = pneg %p135
        %p268 = pneg %p132
        %p269 = scmp.lt.s32.totalorder %s25, 1
        %s270 = scalar_select %p269, %s25, 1
        %s271 = smul.addr %s270, 8
        %s272 = scalar_lea.vmem %s4, %s271
        %p273 = pneg %p161
        %p274 = pneg %p158
        %s275 = sand.u32 %s148, 1
        %s276 = scalar_lea.sflag [#allocation4], %s275
        %s277 = sand.u32 %s148, 1
        %s278 = smul.addr %s277, 8
        %s279 = scalar_lea.vmem [#allocation9], %s278
        %p280 = scmp.lt.s32.totalorder %s25, 1
        %s281 = scalar_select %p280, %s25, 1
        %s282 = smul.addr %s281, 8
        %s283 = scalar_lea.vmem %s4, %s282
        %v284 = vld [vmem:[%s237] sm:$0xff]
        %v285 = vld [vmem:[#allocation6] sm:$0xff]
        %v286 = vld [vmem:[#allocation6 + $0x8] sm:$0xff]
        %v287 = vld [vmem:[%s2] sm:$0x1]
        %v288 = vlaneseq
        %v289 = vand.u32 %v288, 127
        %s290 = sld [smem:[#allocation8]]
        %vm291 = vcmask 261120
        %v293 = vsel %vm291, %v284, 0
        %v296 = vsel %vm291, %v285, 0
        %v299 = vsel %vm291, %v286, 0
        %301 = vmatpush.xpose.msra.mxu0 0.0
        %302 = vmatpush.xpose.msra.mxu0 0.0
        %303 = vmatpush.xpose.msra.mxu0 0.0
        %304 = vmatpush.xpose.msra.mxu0 0.0
        %305 = vmatpush.xpose.msra.mxu0 0.0
        %306 = vmatpush.xpose.msra.mxu0 0.0
        %307 = vmatpush.xpose.msra.mxu0 0.0
        %308 = vmatpush.xpose.msra.mxu0 0.0
        %309 = vmatpush.xpose.msra.mxu0 0.0
        %310 = vmatpush.xpose.msra.mxu0 0.0
        %311 = vmatpush.xpose.msra.mxu0 0.0
        %312 = vmatpush.xpose.msra.mxu0 0.0
        %313 = vmatpush.xpose.msra.mxu0 0.0
        %314 = vmatpush.xpose.msra.mxu0 0.0
        %315 = vmatpush.xpose.msra.mxu0 %v299
        %316 = vmatpush.xpose.msra.mxu0 %v296
        %317 = vmatmul.f32.gmra.mxu0 %v293
        %v318 = vpop.f32.mrf.mxu0
        %v319 = vadd.f32 0.0, %v318
        %320 = vdwg.mxu0
        %s321 = smul.f32 %s290, 2.0
        %v322 = vstv %s321
        %v323 = vmul.f32 %v322, %v319
        %s324 = smul.f32 %s290, %s290
        %v325 = vstv %s324
        %v326 = vmul.f32 %v325, %v287
        %v328 = vperm.slane %v326, 0
        %v330 = vsub.f32 %v323, %v328
        %vm331 = vcmask 130048
        %v332 = vsel %vm331, %v330, -inf
        %333 = vmax.xlane.f32.xlu0 %v332
        %v334 = vpop.xlane.xlu0 %333
        %v335 = vsub.f32 %v330, %v334
        %v336 = vmul.f32 %v335, 1.442695
        %v337 = vpow.pop %v336
        %v338 = vsel %vm331, %v337, 0.0
        %339 = vadd.xlane.f32.xlu0 %v338
        %v340 = vpop.xlane.xlu0 %339
        %v341 = vrcp.pop %v340
        %v342 = vmul.f32 %v337, %v341
        %vm343 = vcmp.eq.f32.partialorder %v330, %v334
        %v344 = vsel %vm343, %v289, 16
        %v345 = vsel %vm331, %v344, 2147483647
        %v346 = vand.u32 %v345, 65535
        %v347 = vshra.s32 %v345, 16
        %v348 = vcvt.s32.f32 %v346
        %v349 = vcvt.s32.f32 %v347
        %350 = vmin.xlane.f32.xlu0 %v349
        %v351 = vpop.xlane.xlu0 %350
        %vm352 = vcmp.eq.f32.partialorder %v349, %v351
        %v353 = vsel %vm352, %v348, inf
        %354 = vmin.xlane.f32.xlu0 %v353
        %v355 = vpop.xlane.xlu0 %354
        %v356 = vcvt.f32.s32 %v355
        %v357 = vcvt.f32.s32 %v351
        %v358 = vshll.u32 %v357, 16
        %v359 = vadd.s32 %v358, %v356
        %vm360 = vcmp.eq.s32.totalorder %v289, %v359
        %v361 = vsel %vm360, 1, 0
        %v362 = vcvt.s32.f32 %v361
        %v364 = vsel %vm331, %v342, 0
        %366 = vmatpush.msra.mxu0 0.0
        %367 = vmatpush.msra.mxu0 0.0
        %368 = vmatpush.msra.mxu0 0.0
        %369 = vmatpush.msra.mxu0 0.0
        %370 = vmatpush.msra.mxu0 0.0
        %371 = vmatpush.msra.mxu0 0.0
        %372 = vmatpush.msra.mxu0 0.0
        %373 = vmatpush.msra.mxu0 0.0
        %374 = vmatpush.msra.mxu0 0.0
        %375 = vmatpush.msra.mxu0 0.0
        %376 = vmatpush.msra.mxu0 0.0
        %377 = vmatpush.msra.mxu0 0.0
        %378 = vmatpush.msra.mxu0 0.0
        %379 = vmatpush.msra.mxu0 0.0
        %380 = vmatpush.msra.mxu0 %v286
        %381 = vmatpush.msra.mxu0 %v285
        %382 = vmatmul.f32.gmra.mxu0 %v364
        %v383 = vpop.f32.mrf.mxu0
        %v384 = vadd.f32 0.0, %v383
        %385 = vdwg.mxu0
        %v386 = vstv %s290
        %v387 = vmul.f32 %v386, %v384
        %v389 = vsel %vm331, %v362, 0
        %391 = vmatpush.msra.mxu0 0.0
        %392 = vmatpush.msra.mxu0 0.0
        %393 = vmatpush.msra.mxu0 0.0
        %394 = vmatpush.msra.mxu0 0.0
        %395 = vmatpush.msra.mxu0 0.0
        %396 = vmatpush.msra.mxu0 0.0
        %397 = vmatpush.msra.mxu0 0.0
        %398 = vmatpush.msra.mxu0 0.0
        %399 = vmatpush.msra.mxu0 0.0
        %400 = vmatpush.msra.mxu0 0.0
        %401 = vmatpush.msra.mxu0 0.0
        %402 = vmatpush.msra.mxu0 0.0
        %403 = vmatpush.msra.mxu0 0.0
        %404 = vmatpush.msra.mxu0 0.0
        %405 = vmatpush.msra.mxu0 %v286
        %406 = vmatpush.msra.mxu0 %v285
        %407 = vmatmul.f32.gmra.mxu0 %v389
        %v408 = vpop.f32.mrf.mxu0
        %v409 = vadd.f32 0.0, %v408
        %410 = vdwg.mxu0
        %v411 = vmul.f32 %v386, %v409
        %v412 = vsub.f32 %v284, %v411
        %v413 = vsub.f32 %v284, %v387
        %v414 = vmul.f32 %v413, %v413
        %v415 = vadd.f32 %v414, 0.0
        %v416 = vmul.f32 %v412, %v412
        %v417 = vadd.f32 %v416, 0.0
        %vm418 = vcmp.eq.s32.totalorder %v289, 0
        %v419 = vsel %vm418, %v359, 0
        %s420 = sld [smem:[#allocation8 + $0x1]]
        %v422 = vsel %vm291, %v412, 0
        %424 = vmatpush.xpose.msra.mxu0 0.0
        %425 = vmatpush.xpose.msra.mxu0 0.0
        %426 = vmatpush.xpose.msra.mxu0 0.0
        %427 = vmatpush.xpose.msra.mxu0 0.0
        %428 = vmatpush.xpose.msra.mxu0 0.0
        %429 = vmatpush.xpose.msra.mxu0 0.0
        %430 = vmatpush.xpose.msra.mxu0 0.0
        %431 = vmatpush.xpose.msra.mxu0 0.0
        %432 = vmatpush.xpose.msra.mxu0 0.0
        %433 = vmatpush.xpose.msra.mxu0 0.0
        %434 = vmatpush.xpose.msra.mxu0 0.0
        %435 = vmatpush.xpose.msra.mxu0 0.0
        %436 = vmatpush.xpose.msra.mxu0 0.0
        %437 = vmatpush.xpose.msra.mxu0 0.0
        %438 = vmatpush.xpose.msra.mxu0 %v299
        %439 = vmatpush.xpose.msra.mxu0 %v296
        %440 = vmatmul.f32.gmra.mxu0 %v422
        %v441 = vpop.f32.mrf.mxu0
        %v442 = vadd.f32 0.0, %v441
        %443 = vdwg.mxu0
        %s444 = smul.f32 %s420, 2.0
        %v445 = vstv %s444
        %v446 = vmul.f32 %v445, %v442
        %s447 = smul.f32 %s420, %s420
        %v448 = vstv %s447
        %v449 = vmul.f32 %v448, %v287
        %v451 = vperm.slane %v449, 0
        %v453 = vsub.f32 %v446, %v451
        %v454 = vsel %vm331, %v453, -inf
        %455 = vmax.xlane.f32.xlu0 %v454
        %v456 = vpop.xlane.xlu0 %455
        %v457 = vsub.f32 %v453, %v456
        %v458 = vmul.f32 %v457, 1.442695
        %v459 = vpow.pop %v458
        %v460 = vsel %vm331, %v459, 0.0
        %461 = vadd.xlane.f32.xlu0 %v460
        %v462 = vpop.xlane.xlu0 %461
        %v463 = vrcp.pop %v462
        %v464 = vmul.f32 %v459, %v463
        %vm465 = vcmp.eq.f32.partialorder %v453, %v456
        %v466 = vsel %vm465, %v289, 16
        %v467 = vsel %vm331, %v466, 2147483647
        %v468 = vand.u32 %v467, 65535
        %v469 = vshra.s32 %v467, 16
        %v470 = vcvt.s32.f32 %v468
        %v471 = vcvt.s32.f32 %v469
        %472 = vmin.xlane.f32.xlu0 %v471
        %v473 = vpop.xlane.xlu0 %472
        %vm474 = vcmp.eq.f32.partialorder %v471, %v473
        %v475 = vsel %vm474, %v470, inf
        %476 = vmin.xlane.f32.xlu0 %v475
        %v477 = vpop.xlane.xlu0 %476
        %v478 = vcvt.f32.s32 %v477
        %v479 = vcvt.f32.s32 %v473
        %v480 = vshll.u32 %v479, 16
        %v481 = vadd.s32 %v480, %v478
        %vm482 = vcmp.eq.s32.totalorder %v289, %v481
        %v483 = vsel %vm482, 1, 0
        %v484 = vcvt.s32.f32 %v483
        %v486 = vsel %vm331, %v464, 0
        %488 = vmatpush.msra.mxu0 0.0
        %489 = vmatpush.msra.mxu0 0.0
        %490 = vmatpush.msra.mxu0 0.0
        %491 = vmatpush.msra.mxu0 0.0
        %492 = vmatpush.msra.mxu0 0.0
        %493 = vmatpush.msra.mxu0 0.0
        %494 = vmatpush.msra.mxu0 0.0
        %495 = vmatpush.msra.mxu0 0.0
        %496 = vmatpush.msra.mxu0 0.0
        %497 = vmatpush.msra.mxu0 0.0
        %498 = vmatpush.msra.mxu0 0.0
        %499 = vmatpush.msra.mxu0 0.0
        %500 = vmatpush.msra.mxu0 0.0
        %501 = vmatpush.msra.mxu0 0.0
        %502 = vmatpush.msra.mxu0 %v286
        %503 = vmatpush.msra.mxu0 %v285
        %504 = vmatmul.f32.gmra.mxu0 %v486
        %v505 = vpop.f32.mrf.mxu0
        %v506 = vadd.f32 0.0, %v505
        %507 = vdwg.mxu0
        %v508 = vstv %s420
        %v509 = vmul.f32 %v508, %v506
        %v511 = vsel %vm331, %v484, 0
        %513 = vmatpush.msra.mxu0 0.0
        %514 = vmatpush.msra.mxu0 0.0
        %515 = vmatpush.msra.mxu0 0.0
        %516 = vmatpush.msra.mxu0 0.0
        %517 = vmatpush.msra.mxu0 0.0
        %518 = vmatpush.msra.mxu0 0.0
        %519 = vmatpush.msra.mxu0 0.0
        %520 = vmatpush.msra.mxu0 0.0
        %521 = vmatpush.msra.mxu0 0.0
        %522 = vmatpush.msra.mxu0 0.0
        %523 = vmatpush.msra.mxu0 0.0
        %524 = vmatpush.msra.mxu0 0.0
        %525 = vmatpush.msra.mxu0 0.0
        %526 = vmatpush.msra.mxu0 0.0
        %527 = vmatpush.msra.mxu0 %v286
        %528 = vmatpush.msra.mxu0 %v285
        %529 = vmatmul.f32.gmra.mxu0 %v511
        %v530 = vpop.f32.mrf.mxu0
        %v531 = vadd.f32 0.0, %v530
        %532 = vdwg.mxu0
        %v533 = vmul.f32 %v508, %v531
        %v534 = vsub.f32 %v412, %v533
        %v535 = vsub.f32 %v413, %v509
        %v536 = vmul.f32 %v535, %v535
        %v537 = vadd.f32 %v415, %v536
        %v538 = vmul.f32 %v534, %v534
        %v539 = vadd.f32 %v417, %v538
        %vm540 = vcmp.eq.s32.totalorder %v289, 1
        %v541 = vsel %vm540, %v481, %v419
        %s542 = sld [smem:[#allocation8 + $0x2]]
        %v544 = vsel %vm291, %v534, 0
        %546 = vmatpush.xpose.msra.mxu0 0.0
        %547 = vmatpush.xpose.msra.mxu0 0.0
        %548 = vmatpush.xpose.msra.mxu0 0.0
        %549 = vmatpush.xpose.msra.mxu0 0.0
        %550 = vmatpush.xpose.msra.mxu0 0.0
        %551 = vmatpush.xpose.msra.mxu0 0.0
        %552 = vmatpush.xpose.msra.mxu0 0.0
        %553 = vmatpush.xpose.msra.mxu0 0.0
        %554 = vmatpush.xpose.msra.mxu0 0.0
        %555 = vmatpush.xpose.msra.mxu0 0.0
        %556 = vmatpush.xpose.msra.mxu0 0.0
        %557 = vmatpush.xpose.msra.mxu0 0.0
        %558 = vmatpush.xpose.msra.mxu0 0.0
        %559 = vmatpush.xpose.msra.mxu0 0.0
        %560 = vmatpush.xpose.msra.mxu0 %v299
        %561 = vmatpush.xpose.msra.mxu0 %v296
        %562 = vmatmul.f32.gmra.mxu0 %v544
        %v563 = vpop.f32.mrf.mxu0
        %v564 = vadd.f32 0.0, %v563
        %565 = vdwg.mxu0
        %s566 = smul.f32 %s542, 2.0
        %v567 = vstv %s566
        %v568 = vmul.f32 %v567, %v564
        %s569 = smul.f32 %s542, %s542
        %v570 = vstv %s569
        %v571 = vmul.f32 %v570, %v287
        %v573 = vperm.slane %v571, 0
        %v575 = vsub.f32 %v568, %v573
        %v576 = vsel %vm331, %v575, -inf
        %577 = vmax.xlane.f32.xlu0 %v576
        %v578 = vpop.xlane.xlu0 %577
        %v579 = vsub.f32 %v575, %v578
        %v580 = vmul.f32 %v579, 1.442695
        %v581 = vpow.pop %v580
        %v582 = vsel %vm331, %v581, 0.0
        %583 = vadd.xlane.f32.xlu0 %v582
        %v584 = vpop.xlane.xlu0 %583
        %v585 = vrcp.pop %v584
        %v586 = vmul.f32 %v581, %v585
        %vm587 = vcmp.eq.f32.partialorder %v575, %v578
        %v588 = vsel %vm587, %v289, 16
        %v589 = vsel %vm331, %v588, 2147483647
        %v590 = vand.u32 %v589, 65535
        %v591 = vshra.s32 %v589, 16
        %v592 = vcvt.s32.f32 %v590
        %v593 = vcvt.s32.f32 %v591
        %594 = vmin.xlane.f32.xlu0 %v593
        %v595 = vpop.xlane.xlu0 %594
        %vm596 = vcmp.eq.f32.partialorder %v593, %v595
        %v597 = vsel %vm596, %v592, inf
        %598 = vmin.xlane.f32.xlu0 %v597
        %v599 = vpop.xlane.xlu0 %598
        %v600 = vcvt.f32.s32 %v599
        %v601 = vcvt.f32.s32 %v595
        %v602 = vshll.u32 %v601, 16
        %v603 = vadd.s32 %v602, %v600
        %vm604 = vcmp.eq.s32.totalorder %v289, %v603
        %v605 = vsel %vm604, 1, 0
        %v606 = vcvt.s32.f32 %v605
        %v608 = vsel %vm331, %v586, 0
        %610 = vmatpush.msra.mxu0 0.0
        %611 = vmatpush.msra.mxu0 0.0
        %612 = vmatpush.msra.mxu0 0.0
        %613 = vmatpush.msra.mxu0 0.0
        %614 = vmatpush.msra.mxu0 0.0
        %615 = vmatpush.msra.mxu0 0.0
        %616 = vmatpush.msra.mxu0 0.0
        %617 = vmatpush.msra.mxu0 0.0
        %618 = vmatpush.msra.mxu0 0.0
        %619 = vmatpush.msra.mxu0 0.0
        %620 = vmatpush.msra.mxu0 0.0
        %621 = vmatpush.msra.mxu0 0.0
        %622 = vmatpush.msra.mxu0 0.0
        %623 = vmatpush.msra.mxu0 0.0
        %624 = vmatpush.msra.mxu0 %v286
        %625 = vmatpush.msra.mxu0 %v285
        %626 = vmatmul.f32.gmra.mxu0 %v608
        %v627 = vpop.f32.mrf.mxu0
        %v628 = vadd.f32 0.0, %v627
        %629 = vdwg.mxu0
        %v630 = vstv %s542
        %v631 = vmul.f32 %v630, %v628
        %v633 = vsel %vm331, %v606, 0
        %635 = vmatpush.msra.mxu0 0.0
        %636 = vmatpush.msra.mxu0 0.0
        %637 = vmatpush.msra.mxu0 0.0
        %638 = vmatpush.msra.mxu0 0.0
        %639 = vmatpush.msra.mxu0 0.0
        %640 = vmatpush.msra.mxu0 0.0
        %641 = vmatpush.msra.mxu0 0.0
        %642 = vmatpush.msra.mxu0 0.0
        %643 = vmatpush.msra.mxu0 0.0
        %644 = vmatpush.msra.mxu0 0.0
        %645 = vmatpush.msra.mxu0 0.0
        %646 = vmatpush.msra.mxu0 0.0
        %647 = vmatpush.msra.mxu0 0.0
        %648 = vmatpush.msra.mxu0 0.0
        %649 = vmatpush.msra.mxu0 %v286
        %650 = vmatpush.msra.mxu0 %v285
        %651 = vmatmul.f32.gmra.mxu0 %v633
        %v652 = vpop.f32.mrf.mxu0
        %v653 = vadd.f32 0.0, %v652
        %654 = vdwg.mxu0
        %v655 = vmul.f32 %v630, %v653
        %v656 = vsub.f32 %v534, %v655
        %v657 = vsub.f32 %v535, %v631
        %v658 = vmul.f32 %v657, %v657
        %v659 = vadd.f32 %v537, %v658
        %v660 = vmul.f32 %v656, %v656
        %v661 = vadd.f32 %v539, %v660
        %vm662 = vcmp.eq.s32.totalorder %v289, 2
        %v663 = vsel %vm662, %v603, %v541
        %s664 = sld [smem:[#allocation8 + $0x3]]
        %v666 = vsel %vm291, %v656, 0
        %668 = vmatpush.xpose.msra.mxu0 0.0
        %669 = vmatpush.xpose.msra.mxu0 0.0
        %670 = vmatpush.xpose.msra.mxu0 0.0
        %671 = vmatpush.xpose.msra.mxu0 0.0
        %672 = vmatpush.xpose.msra.mxu0 0.0
        %673 = vmatpush.xpose.msra.mxu0 0.0
        %674 = vmatpush.xpose.msra.mxu0 0.0
        %675 = vmatpush.xpose.msra.mxu0 0.0
        %676 = vmatpush.xpose.msra.mxu0 0.0
        %677 = vmatpush.xpose.msra.mxu0 0.0
        %678 = vmatpush.xpose.msra.mxu0 0.0
        %679 = vmatpush.xpose.msra.mxu0 0.0
        %680 = vmatpush.xpose.msra.mxu0 0.0
        %681 = vmatpush.xpose.msra.mxu0 0.0
        %682 = vmatpush.xpose.msra.mxu0 %v299
        %683 = vmatpush.xpose.msra.mxu0 %v296
        %684 = vmatmul.f32.gmra.mxu0 %v666
        %v685 = vpop.f32.mrf.mxu0
        %v686 = vadd.f32 0.0, %v685
        %687 = vdwg.mxu0
        %s688 = smul.f32 %s664, 2.0
        %v689 = vstv %s688
        %v690 = vmul.f32 %v689, %v686
        %s691 = smul.f32 %s664, %s664
        %v692 = vstv %s691
        %v693 = vmul.f32 %v692, %v287
        %v695 = vperm.slane %v693, 0
        %v697 = vsub.f32 %v690, %v695
        %v698 = vsel %vm331, %v697, -inf
        %699 = vmax.xlane.f32.xlu0 %v698
        %v700 = vpop.xlane.xlu0 %699
        %v701 = vsub.f32 %v697, %v700
        %v702 = vmul.f32 %v701, 1.442695
        %v703 = vpow.pop %v702
        %v704 = vsel %vm331, %v703, 0.0
        %705 = vadd.xlane.f32.xlu0 %v704
        %v706 = vpop.xlane.xlu0 %705
        %v707 = vrcp.pop %v706
        %v708 = vmul.f32 %v703, %v707
        %vm709 = vcmp.eq.f32.partialorder %v697, %v700
        %v710 = vsel %vm709, %v289, 16
        %v711 = vsel %vm331, %v710, 2147483647
        %v712 = vand.u32 %v711, 65535
        %v713 = vshra.s32 %v711, 16
        %v714 = vcvt.s32.f32 %v712
        %v715 = vcvt.s32.f32 %v713
        %716 = vmin.xlane.f32.xlu0 %v715
        %v717 = vpop.xlane.xlu0 %716
        %vm718 = vcmp.eq.f32.partialorder %v715, %v717
        %v719 = vsel %vm718, %v714, inf
        %720 = vmin.xlane.f32.xlu0 %v719
        %v721 = vpop.xlane.xlu0 %720
        %v722 = vcvt.f32.s32 %v721
        %v723 = vcvt.f32.s32 %v717
        %v724 = vshll.u32 %v723, 16
        %v725 = vadd.s32 %v724, %v722
        %vm726 = vcmp.eq.s32.totalorder %v289, %v725
        %v727 = vsel %vm726, 1, 0
        %v728 = vcvt.s32.f32 %v727
        %v730 = vsel %vm331, %v708, 0
        %732 = vmatpush.msra.mxu0 0.0
        %733 = vmatpush.msra.mxu0 0.0
        %734 = vmatpush.msra.mxu0 0.0
        %735 = vmatpush.msra.mxu0 0.0
        %736 = vmatpush.msra.mxu0 0.0
        %737 = vmatpush.msra.mxu0 0.0
        %738 = vmatpush.msra.mxu0 0.0
        %739 = vmatpush.msra.mxu0 0.0
        %740 = vmatpush.msra.mxu0 0.0
        %741 = vmatpush.msra.mxu0 0.0
        %742 = vmatpush.msra.mxu0 0.0
        %743 = vmatpush.msra.mxu0 0.0
        %744 = vmatpush.msra.mxu0 0.0
        %745 = vmatpush.msra.mxu0 0.0
        %746 = vmatpush.msra.mxu0 %v286
        %747 = vmatpush.msra.mxu0 %v285
        %748 = vmatmul.f32.gmra.mxu0 %v730
        %v749 = vpop.f32.mrf.mxu0
        %v750 = vadd.f32 0.0, %v749
        %751 = vdwg.mxu0
        %v752 = vstv %s664
        %v753 = vmul.f32 %v752, %v750
        %v755 = vsel %vm331, %v728, 0
        %757 = vmatpush.msra.mxu0 0.0
        %758 = vmatpush.msra.mxu0 0.0
        %759 = vmatpush.msra.mxu0 0.0
        %760 = vmatpush.msra.mxu0 0.0
        %761 = vmatpush.msra.mxu0 0.0
        %762 = vmatpush.msra.mxu0 0.0
        %763 = vmatpush.msra.mxu0 0.0
        %764 = vmatpush.msra.mxu0 0.0
        %765 = vmatpush.msra.mxu0 0.0
        %766 = vmatpush.msra.mxu0 0.0
        %767 = vmatpush.msra.mxu0 0.0
        %768 = vmatpush.msra.mxu0 0.0
        %769 = vmatpush.msra.mxu0 0.0
        %770 = vmatpush.msra.mxu0 0.0
        %771 = vmatpush.msra.mxu0 %v286
        %772 = vmatpush.msra.mxu0 %v285
        %773 = vmatmul.f32.gmra.mxu0 %v755
        %v774 = vpop.f32.mrf.mxu0
        %v775 = vadd.f32 0.0, %v774
        %776 = vdwg.mxu0
        %v777 = vmul.f32 %v752, %v775
        %v778 = vsub.f32 %v656, %v777
        %v779 = vsub.f32 %v657, %v753
        %v780 = vmul.f32 %v779, %v779
        %v781 = vadd.f32 %v659, %v780
        %v782 = vmul.f32 %v778, %v778
        %v783 = vadd.f32 %v661, %v782
        %vm784 = vcmp.eq.s32.totalorder %v289, 3
        %v785 = vsel %vm784, %v725, %v663
        %v786 = vsel %vm291, %v781, 0.0
        %787 = vadd.xlane.f32.xlu0 %v786
        %v788 = vpop.xlane.xlu0 %787
        %v789 = vrot.slane %v788, 4
        %v790 = vadd.f32 %v788, %v789
        %v791 = vrot.slane %v790, 2
        %v792 = vadd.f32 %v790, %v791
        %v793 = vrot.slane %v792, 1
        %v794 = vadd.f32 %v792, %v793
        %s795 = vtos %v794
        %v796 = vsel %vm291, %v783, 0.0
        %797 = vadd.xlane.f32.xlu0 %v796
        %v798 = vpop.xlane.xlu0 %797
        %v799 = vrot.slane %v798, 4
        %v800 = vadd.f32 %v798, %v799
        %v801 = vrot.slane %v800, 2
        %v802 = vadd.f32 %v800, %v801
        %v803 = vrot.slane %v802, 1
        %v804 = vadd.f32 %v802, %v803
        %s805 = vtos %v804
        %v806 = vsub.f32 %v778, %v779
        %v807 = vmul.f32 %v806, %v806
        %v808 = vsel %vm291, %v807, 0.0
        %809 = vadd.xlane.f32.xlu0 %v808
        %v810 = vpop.xlane.xlu0 %809
        %v811 = vrot.slane %v810, 4
        %v812 = vadd.f32 %v810, %v811
        %v813 = vrot.slane %v812, 2
        %v814 = vadd.f32 %v812, %v813
        %v815 = vrot.slane %v814, 1
        %v816 = vadd.f32 %v814, %v815
        %s817 = vtos %v816
        %vm818 = vcmask 31744
        %819 = vst.msk [vmem:[%s283] sm:$0xff] %vm818, %v785
        %v820 = vlaneseq
        %v821 = vshrl.u32 %v820, 7
        %vm822 = vcmp.eq.s32.totalorder %v821, 0
        %vm823 = vcmp.eq.s32.totalorder %v821, 1
        %vm824 = vcmp.eq.s32.totalorder %v821, 2
        %v825 = vstv %s817
        %v826 = vsel %vm824, %v825, 0.0
        %v827 = vstv %s805
        %v828 = vsel %vm823, %v827, %v826
        %v829 = vstv %s795
        %v830 = vsel %vm822, %v829, %v828
        %831 = vst [vmem:[%s279] sm:$0xff] %v830
        %p832 = scmp.lt.s32.totalorder %s25, 1
        %s833 = scalar_select %p832, %s25, 1
        %s834 = smul.addr %s833, 8
        %s835 = scalar_lea.vmem %s4, %s834
        %s836 = sand.u32 %s148, 1
        %s837 = scalar_lea.sflag [#allocation4], %s836
        %s838 = sand.u32 %s148, 1
        %s839 = smul.addr %s838, 8
        %s840 = scalar_lea.vmem [#allocation9], %s839
        // Predicated region
        $region49: #{tpu_custom_call.1} parent=35 // pred_check
          %p841 = pneg %p132
        $region50: #{tpu_custom_call.1} parent=35 // pred_check_branch
          %843 = sbr.rel (%p841) target = $region52
        $region51: #{tpu_custom_call.1} parent=35 // pred_region
          _
        $region52: #{tpu_custom_call.1} parent=35 // pred_fallthru
          _
        // Predicated region
        $region53: #{tpu_custom_call.1} parent=35 // pred_check
          %p844 = pneg %p158
        $region54: #{tpu_custom_call.1} parent=35 // pred_check_branch
          %846 = sbr.rel (%p844) target = $region56
        $region55: #{tpu_custom_call.1} parent=35 // pred_region
          %848 = vsyncadd %s837, 0
          %s849 = smul.addr %s25, 8
          %s850 = scalar_lea.hbm %s5, %s849
          %s852 = sshll.u32 %s840, 4
          %s853 = int_to_ptr.vmem [resolvable:$true] %s852
          %s854 = sshll.u32 %s850, 4
          %s855 = int_to_ptr.hbm [resolvable:$true] %s854
          %857 = dma.vmem_to_hbm [thread:$0]  %s853, 128, %s855, %s837
        $region56: #{tpu_custom_call.1} parent=35 // pred_fallthru
          _
      $region36: #{tpu_custom_call.1} parent=5 // pred_fallthru
        _
      %p858 = scmp.le.s32.totalorder 2, %s20
      // Predicated region
      $region57: #{tpu_custom_call.1} parent=5 // pred_check
        %p859 = pneg %p858
      $region58: #{tpu_custom_call.1} parent=5 // pred_check_branch
        %861 = sbr.rel (%p859) target = $region60
      $region59: #{tpu_custom_call.1} parent=5 // pred_region
        %s862 = ssub.s32 %s20, 2
        // Predicated region
        $region61: #{tpu_custom_call.1} parent=59 // pred_check
          %p863 = pneg %p138
        $region62: #{tpu_custom_call.1} parent=59 // pred_check_branch
          %865 = sbr.rel (%p863) target = $region64
        $region63: #{tpu_custom_call.1} parent=59 // pred_region
          %p866 = scmp.lt.s32.totalorder %s26, 1
          %s867 = scalar_select %p866, %s26, 1
          %s868 = smul.addr %s867, 8
          %s869 = scalar_lea.vmem %s4, %s868
        $region64: #{tpu_custom_call.1} parent=59 // pred_fallthru
          _
        // Predicated region
        $region65: #{tpu_custom_call.1} parent=59 // pred_check
          %p870 = pneg %p164
        $region66: #{tpu_custom_call.1} parent=59 // pred_check_branch
          %872 = sbr.rel (%p870) target = $region68
        $region67: #{tpu_custom_call.1} parent=59 // pred_region
          %s873 = sand.u32 %s149, 1
          %s874 = scalar_lea.sflag [#allocation4], %s873
          %s875 = sand.u32 %s149, 1
          %s876 = smul.addr %s875, 8
          %s877 = scalar_lea.vmem [#allocation9], %s876
          %879 = dma.done %s874, 128
        $region68: #{tpu_custom_call.1} parent=59 // pred_fallthru
          _
      $region60: #{tpu_custom_call.1} parent=5 // pred_fallthru
        _
    $region6: #{tpu_custom_call.1} parent=1 // loop_footer
      %s24 = sadd.s32 1, %s20
    $region7: #{tpu_custom_call.1} parent=1 // loop_footer_branch
      %19 = sbr.rel target = $region3
    $region8: #{tpu_custom_call.1} parent=1 // loop_exit
      _
    %880 = vsyncpa [#allocation3], 1
    %s881 = scalar_lea.sflag [#allocation3], 1
    %882 = vsyncpa %s881, 1
    %883 = vsyncpa [#allocation7], 1
    %884 = vsyncpa [#allocation4], 1
    %s885 = scalar_lea.sflag [#allocation4], 1
    %886 = vsyncpa %s885, 1
    %887 = vsyncpa [#allocation5], 1
    %s888 = scalar_lea.sflag [#allocation5], 1
    %889 = vsyncpa %s888, 1

</llo_original>
